<compile_context>
chip_gen: v7x
topology: tpu7x:2x2x1
jax: 0.10.0
libtpu: 0.0.40
codegen_flags: <defaults>
</compile_context>

<pallas_src>
import functools

import jax
import jax.numpy as jnp
from jax.experimental import pallas as pl
from jax.experimental.pallas import tpu as pltpu


# ---------------------------------------------------------------------------
# Primary path: zero-compute HBM -> HBM chunked DMA concat on the flattened
# lane axis, sharded over a "parallel" grid axis (both TCs on v7x).
# ---------------------------------------------------------------------------
_NUM_SHARDS = 2                  # v7x has 2 TensorCores per chip.
_TARGET_CHUNK_BYTES = 1 << 20    # ~1 MiB per DMA chunk.
_MAX_CHUNKS_PER_INPUT = 8


def _chunk_plan(lane_sizes, itemsize, n_rows):
    """Static chunk plan: list of (input_idx, src_lane0, dst_lane0, lane_len).

    Chunk boundaries are multiples of 128 lanes (every lane_size is already a
    multiple of 128 on this path), so every DMA lands on a clean lane range.
    """
    plan = []
    dst_off = 0
    for idx, length in enumerate(lane_sizes):
        nbytes = length * itemsize * n_rows
        n_chunks = max(1, min(_MAX_CHUNKS_PER_INPUT,
                              -(-nbytes // _TARGET_CHUNK_BYTES)))
        base = -(-length // n_chunks)       # ceil(length / n_chunks)
        base = -(-base // 128) * 128        # round up to a multiple of 128
        start = 0
        while start < length:
            size = min(base, length - start)
            plan.append((idx, start, dst_off + start, size))
            start += size
        dst_off += length
    return plan


def _concat3_dma_kernel(plan, num_shards, a_hbm, b_hbm, c_hbm, o_hbm, sem):
    """a/b/c/o are raw HBM refs of shapes (N, L1), (N, L2), (N, L3), (N, Lt).

    Each grid point (shard) starts all of its chunk DMAs before waiting on any
    of them; chunks go straight from input HBM into the output's lane slice.
    No VMEM staging, no in-kernel vector loads/stores.
    """
    srcs = (a_hbm, b_hbm, c_hbm)
    pid = pl.program_id(0)
    for shard in range(num_shards):
        shard_chunks = [(j, entry) for j, entry in enumerate(plan)
                        if j % num_shards == shard]
        if not shard_chunks:
            continue

        @pl.when(pid == shard)
        def _(shard_chunks=shard_chunks):
            copies = []
            for j, (idx, s0, d0, sz) in shard_chunks:
                cp = pltpu.make_async_copy(
                    srcs[idx].at[:, s0:s0 + sz],
                    o_hbm.at[:, d0:d0 + sz],
                    sem.at[j])
                cp.start()
                copies.append(cp)
            for cp in copies:
                cp.wait()


def _concat3_dma(af, bf, cf):
    n = af.shape[0]
    lanes = (af.shape[1], bf.shape[1], cf.shape[1])
    lt = sum(lanes)
    plan = _chunk_plan(lanes, af.dtype.itemsize, n)
    num_shards = min(_NUM_SHARDS, len(plan))
    kernel = functools.partial(_concat3_dma_kernel, plan, num_shards)
    return pl.pallas_call(
        kernel,
        out_shape=jax.ShapeDtypeStruct((n, lt), af.dtype),
        grid=(num_shards,),
        in_specs=[
            pl.BlockSpec(memory_space=pl.ANY),
            pl.BlockSpec(memory_space=pl.ANY),
            pl.BlockSpec(memory_space=pl.ANY),
        ],
        out_specs=pl.BlockSpec(memory_space=pl.ANY),
        scratch_shapes=[pltpu.SemaphoreType.DMA((len(plan),))],
        compiler_params=pltpu.CompilerParams(
            dimension_semantics=("parallel",)),
    )(af, bf, cf)


# ---------------------------------------------------------------------------
# Fallback path (odd spatial sizes -> misaligned lane offsets): pipelined
# VMEM copy, channel-axis concat, now tiled along H*W so per-step VMEM stays
# small (safe on v5e 16 MiB scoped default and v7x 64 MiB physical VMEM).
# ---------------------------------------------------------------------------
def _concat3_vmem_kernel(a_ref, b_ref, c_ref, o_ref):
    c1 = a_ref.shape[1]
    c2 = b_ref.shape[1]
    c3 = c_ref.shape[1]
    # TODO(synk): channel offsets c1 / c1+c2 are sublane-misaligned for odd
    # channel counts -> masked stores; acceptable on this rarely-taken,
    # HBM-bound path (only hit when H*W % 128 != 0).
    o_ref[:, 0:c1, :] = a_ref[...]
    o_ref[:, c1:c1 + c2, :] = b_ref[...]
    o_ref[:, c1 + c2:c1 + c2 + c3, :] = c_ref[...]


def _concat3_vmem(x1, x2, x3):
    n, c1, hw = x1.shape
    c2 = x2.shape[1]
    c3 = x3.shape[1]
    ct = c1 + c2 + c3
    itemsize = x1.dtype.itemsize
    # Per-step VMEM ~ 2 * (inputs + output) = 4 * Ct * hw_tile * itemsize with
    # double buffering; keep it under ~8 MiB.
    budget = 8 << 20
    max_tile = max(128, (budget // (4 * ct * itemsize)) // 128 * 128)
    hw_tile = hw if hw <= max_tile else max_tile
    return pl.pallas_call(
        _concat3_vmem_kernel,
        out_shape=jax.ShapeDtypeStruct((n, ct, hw), x1.dtype),
        grid=(n, pl.cdiv(hw, hw_tile)),
        in_specs=[
            pl.BlockSpec((1, c1, hw_tile), lambda i, j: (i, 0, j)),
            pl.BlockSpec((1, c2, hw_tile), lambda i, j: (i, 0, j)),
            pl.BlockSpec((1, c3, hw_tile), lambda i, j: (i, 0, j)),
        ],
        out_specs=pl.BlockSpec((1, ct, hw_tile), lambda i, j: (i, 0, j)),
        compiler_params=pltpu.CompilerParams(
            dimension_semantics=("parallel", "parallel")),
    )(x1, x2, x3)


# ---------------------------------------------------------------------------
# Differentiable wrapper (VJP of concat = split of the cotangent).
# ---------------------------------------------------------------------------
def _concat3_impl(chan_sizes, a, b, c):
    c1, c2, c3 = chan_sizes
    n, _, h, w = a.shape
    hw = h * w
    ct = c1 + c2 + c3
    l1, l2, l3 = c1 * hw, c2 * hw, c3 * hw
    # Lane-axis flatten: NCHW -> (N, C*H*W) is a free, contiguous reshape and
    # turns the channel concat into a lane concat with contiguous slices.
    if l1 % 128 == 0 and l2 % 128 == 0:
        out = _concat3_dma(a.reshape(n, l1), b.reshape(n, l2), c.reshape(n, l3))
    else:
        out = _concat3_vmem(a.reshape(n, c1, hw), b.reshape(n, c2, hw),
                            c.reshape(n, c3, hw))
    return out.reshape(n, ct, h, w)


@functools.partial(jax.custom_vjp, nondiff_argnums=(0,))
def _concat3_channels(chan_sizes, a, b, c):
    return _concat3_impl(chan_sizes, a, b, c)


def _concat3_fwd(chan_sizes, a, b, c):
    return _concat3_impl(chan_sizes, a, b, c), None


def _concat3_bwd(chan_sizes, _, g):
    c1, c2, c3 = chan_sizes
    # `.detach()` on inputs 2/3 is handled by stop_gradient in the module
    # wrapper; the slices for b/c then feed stop_gradient's zero transpose and
    # are dead-code-eliminated by XLA, so they cost nothing there.
    return (g[:, 0:c1], g[:, c1:c1 + c2], g[:, c1 + c2:c1 + c2 + c3])


_concat3_channels.defvjp(_concat3_fwd, _concat3_bwd)


def concat3_channels(a, b, c):
    """torch.cat([a, b, c], dim=1) for NCHW tensors, via Pallas on TPU."""
    assert a.ndim == 4 and b.ndim == 4 and c.ndim == 4
    assert a.shape[0] == b.shape[0] == c.shape[0]
    assert a.shape[2:] == b.shape[2:] == c.shape[2:]
    assert a.dtype == b.dtype == c.dtype
    return _concat3_channels((a.shape[1], b.shape[1], c.shape[1]), a, b, c)


class FeatureConcat3:
    """JAX/Pallas port of VisDroneWeb utils.layers.FeatureConcat3."""

    def __init__(self, layers):
        self.layers = layers
        self.multiple = len(layers) > 1  # API parity with the PyTorch module.

    def __call__(self, x, outputs):
        a = outputs[self.layers[0]]
        b = jax.lax.stop_gradient(outputs[self.layers[1]])  # .detach()
        c = jax.lax.stop_gradient(outputs[self.layers[2]])  # .detach()
        return concat3_channels(a, b, c)


if __name__ == "__main__":
    key = jax.random.PRNGKey(0)
    k0, k1, k2, k3 = jax.random.split(key, 4)

    N, H, W = 2, 16, 16
    C1, C2, C3 = 4, 6, 8  # channel counts of the three routed feature maps

    # Synthetic "outputs" list from previous layers (NCHW); x is unused by the
    # reference module's forward, as in PyTorch.
    x = jax.random.normal(k0, (N, C1, H, W), dtype=jnp.float32)
    outputs = [
        jax.random.normal(k1, (N, C1, H, W), dtype=jnp.float32),
        jax.random.normal(k2, (N, C2, H, W), dtype=jnp.float32),
        jax.random.normal(k3, (N, C3, H, W), dtype=jnp.float32),
    ]

    mod = FeatureConcat3(layers=[0, 1, 2])

    # Forward, aligned (HBM->HBM chunked DMA) path: H*W = 256 (multiple of 128).
    y = jax.block_until_ready(mod(x, outputs))
    ref = jnp.concatenate([outputs[0], outputs[1], outputs[2]], axis=1)
    assert y.shape == (N, C1 + C2 + C3, H, W), y.shape
    assert y.dtype == ref.dtype
    assert bool(jnp.allclose(y, ref)), "mismatch vs reference concat (DMA path)"

    # Same path, bf16 (packed dtype) to cover the packed-layout lane slicing.
    out_bf16 = [o.astype(jnp.bfloat16) for o in outputs]
    yb = jax.block_until_ready(mod(x, out_bf16))
    refb = jnp.concatenate(out_bf16, axis=1)
    assert yb.dtype == jnp.bfloat16
    assert bool(jnp.array_equal(yb, refb)), "mismatch (DMA path, bf16)"

    # Forward, misaligned-fallback path: H*W = 36 (not a multiple of 128).
    Hs = Ws = 6
    small = [
        jax.random.normal(k1, (N, C1, Hs, Ws), dtype=jnp.float32),
        jax.random.normal(k2, (N, C2, Hs, Ws), dtype=jnp.float32),
        jax.random.normal(k3, (N, C3, Hs, Ws), dtype=jnp.float32),
    ]
    ys = jax.block_until_ready(mod(x, small))
    refs = jnp.concatenate(small, axis=1)
    assert bool(jnp.allclose(ys, refs)), "mismatch vs reference concat (VMEM path)"

    # Gradient flows only through the first (non-detached) input.
    def loss(a_in):
        return jnp.sum(mod(x, [a_in, outputs[1], outputs[2]]))

    ga = jax.block_until_ready(jax.grad(loss)(outputs[0]))
    assert ga.shape == outputs[0].shape
    assert bool(jnp.allclose(ga, jnp.ones_like(ga))), "bad VJP for first input"

    print("KERNEL_OK")
</pallas_src>

<mosaic_0001>
module attributes {stable_mosaic.version = 11 : i64} {
  func.func @_concat3_dma_kernel(%arg0: i32, %arg1: memref<2x1024xf32, #tpu.memory_space<any>>, %arg2: memref<2x1536xf32, #tpu.memory_space<any>>, %arg3: memref<2x2048xf32, #tpu.memory_space<any>>, %arg4: memref<2x4608xf32, #tpu.memory_space<any>>, %arg5: memref<3x!tpu.dma_semaphore, #tpu.memory_space<semaphore_mem>>) attributes {dimension_semantics = [#tpu.dimension_semantics<parallel>], iteration_bounds = array<i64: 2>, scalar_prefetch = 0 : i64, scratch_operands = 1 : i64, tpu.core_type = #tpu.core_type<tc>, window_params = [{}, {}, {}, {}]} {
    %c0_i32 = arith.constant 0 : i32
    %0 = arith.cmpi eq, %arg0, %c0_i32 : i32
    %1 = arith.extui %0 : i1 to i32
    %c0_i32_0 = arith.constant 0 : i32
    %2 = arith.cmpi ne, %1, %c0_i32_0 : i32
    scf.if %2 {
      %c0_i32_2 = arith.constant 0 : i32
      %c0_i32_3 = arith.constant 0 : i32
      %c0_i32_4 = arith.constant 0 : i32
      %6 = tpu.memref_slice %arg1[%c0_i32_3, %c0_i32_4] : memref<2x1024xf32, #tpu.memory_space<any>> -> memref<2x1024xf32, #tpu.memory_space<any>>
      %c0_i32_5 = arith.constant 0 : i32
      %c0_i32_6 = arith.constant 0 : i32
      %7 = tpu.memref_slice %arg4[%c0_i32_5, %c0_i32_6] : memref<2x4608xf32, #tpu.memory_space<any>> -> memref<2x1024xf32, #tpu.memory_space<any>>
      %8 = tpu.memref_slice %arg5[%c0_i32_2] : memref<3x!tpu.dma_semaphore, #tpu.memory_space<semaphore_mem>> -> memref<1x!tpu.dma_semaphore, #tpu.memory_space<semaphore_mem>>
      %9 = tpu.memref_squeeze %8 : memref<1x!tpu.dma_semaphore, #tpu.memory_space<semaphore_mem>> -> memref<!tpu.dma_semaphore, #tpu.memory_space<semaphore_mem>>
      tpu.enqueue_dma source(%6 : memref<2x1024xf32, #tpu.memory_space<any>>) target(%7 : memref<2x1024xf32, #tpu.memory_space<any>>) target_semaphore(%9 : memref<!tpu.dma_semaphore, #tpu.memory_space<semaphore_mem>>)
      %c2_i32 = arith.constant 2 : i32
      %c0_i32_7 = arith.constant 0 : i32
      %c0_i32_8 = arith.constant 0 : i32
      %10 = tpu.memref_slice %arg3[%c0_i32_7, %c0_i32_8] : memref<2x2048xf32, #tpu.memory_space<any>> -> memref<2x2048xf32, #tpu.memory_space<any>>
      %c0_i32_9 = arith.constant 0 : i32
      %c2560_i32 = arith.constant 2560 : i32
      %11 = tpu.memref_slice %arg4[%c0_i32_9, %c2560_i32] : memref<2x4608xf32, #tpu.memory_space<any>> -> memref<2x2048xf32, #tpu.memory_space<any>>
      %12 = tpu.memref_slice %arg5[%c2_i32] : memref<3x!tpu.dma_semaphore, #tpu.memory_space<semaphore_mem>> -> memref<1x!tpu.dma_semaphore, #tpu.memory_space<semaphore_mem>>
      %13 = tpu.memref_squeeze %12 : memref<1x!tpu.dma_semaphore, #tpu.memory_space<semaphore_mem>> -> memref<!tpu.dma_semaphore, #tpu.memory_space<semaphore_mem>>
      tpu.enqueue_dma source(%10 : memref<2x2048xf32, #tpu.memory_space<any>>) target(%11 : memref<2x2048xf32, #tpu.memory_space<any>>) target_semaphore(%13 : memref<!tpu.dma_semaphore, #tpu.memory_space<semaphore_mem>>)
      %c0_i32_10 = arith.constant 0 : i32
      %c0_i32_11 = arith.constant 0 : i32
      %c0_i32_12 = arith.constant 0 : i32
      %14 = tpu.memref_slice %arg1[%c0_i32_11, %c0_i32_12] : memref<2x1024xf32, #tpu.memory_space<any>> -> memref<2x1024xf32, #tpu.memory_space<any>>
      %c0_i32_13 = arith.constant 0 : i32
      %c0_i32_14 = arith.constant 0 : i32
      %15 = tpu.memref_slice %arg4[%c0_i32_13, %c0_i32_14] : memref<2x4608xf32, #tpu.memory_space<any>> -> memref<2x1024xf32, #tpu.memory_space<any>>
      %16 = tpu.memref_slice %arg5[%c0_i32_10] : memref<3x!tpu.dma_semaphore, #tpu.memory_space<semaphore_mem>> -> memref<1x!tpu.dma_semaphore, #tpu.memory_space<semaphore_mem>>
      %17 = tpu.memref_squeeze %16 : memref<1x!tpu.dma_semaphore, #tpu.memory_space<semaphore_mem>> -> memref<!tpu.dma_semaphore, #tpu.memory_space<semaphore_mem>>
      tpu.wait_dma2 semaphore(%17 : memref<!tpu.dma_semaphore, #tpu.memory_space<semaphore_mem>>) src(%14 : memref<2x1024xf32, #tpu.memory_space<any>>) dst(%15 : memref<2x1024xf32, #tpu.memory_space<any>>)
      %c2_i32_15 = arith.constant 2 : i32
      %c0_i32_16 = arith.constant 0 : i32
      %c0_i32_17 = arith.constant 0 : i32
      %18 = tpu.memref_slice %arg3[%c0_i32_16, %c0_i32_17] : memref<2x2048xf32, #tpu.memory_space<any>> -> memref<2x2048xf32, #tpu.memory_space<any>>
      %c0_i32_18 = arith.constant 0 : i32
      %c2560_i32_19 = arith.constant 2560 : i32
      %19 = tpu.memref_slice %arg4[%c0_i32_18, %c2560_i32_19] : memref<2x4608xf32, #tpu.memory_space<any>> -> memref<2x2048xf32, #tpu.memory_space<any>>
      %20 = tpu.memref_slice %arg5[%c2_i32_15] : memref<3x!tpu.dma_semaphore, #tpu.memory_space<semaphore_mem>> -> memref<1x!tpu.dma_semaphore, #tpu.memory_space<semaphore_mem>>
      %21 = tpu.memref_squeeze %20 : memref<1x!tpu.dma_semaphore, #tpu.memory_space<semaphore_mem>> -> memref<!tpu.dma_semaphore, #tpu.memory_space<semaphore_mem>>
      tpu.wait_dma2 semaphore(%21 : memref<!tpu.dma_semaphore, #tpu.memory_space<semaphore_mem>>) src(%18 : memref<2x2048xf32, #tpu.memory_space<any>>) dst(%19 : memref<2x2048xf32, #tpu.memory_space<any>>)
    } else {
    }
    %c1_i32 = arith.constant 1 : i32
    %3 = arith.cmpi eq, %arg0, %c1_i32 : i32
    %4 = arith.extui %3 : i1 to i32
    %c0_i32_1 = arith.constant 0 : i32
    %5 = arith.cmpi ne, %4, %c0_i32_1 : i32
    scf.if %5 {
      %c1_i32_2 = arith.constant 1 : i32
      %c0_i32_3 = arith.constant 0 : i32
      %c0_i32_4 = arith.constant 0 : i32
      %6 = tpu.memref_slice %arg2[%c0_i32_3, %c0_i32_4] : memref<2x1536xf32, #tpu.memory_space<any>> -> memref<2x1536xf32, #tpu.memory_space<any>>
      %c0_i32_5 = arith.constant 0 : i32
      %c1024_i32 = arith.constant 1024 : i32
      %7 = tpu.memref_slice %arg4[%c0_i32_5, %c1024_i32] : memref<2x4608xf32, #tpu.memory_space<any>> -> memref<2x1536xf32, #tpu.memory_space<any>>
      %8 = tpu.memref_slice %arg5[%c1_i32_2] : memref<3x!tpu.dma_semaphore, #tpu.memory_space<semaphore_mem>> -> memref<1x!tpu.dma_semaphore, #tpu.memory_space<semaphore_mem>>
      %9 = tpu.memref_squeeze %8 : memref<1x!tpu.dma_semaphore, #tpu.memory_space<semaphore_mem>> -> memref<!tpu.dma_semaphore, #tpu.memory_space<semaphore_mem>>
      tpu.enqueue_dma source(%6 : memref<2x1536xf32, #tpu.memory_space<any>>) target(%7 : memref<2x1536xf32, #tpu.memory_space<any>>) target_semaphore(%9 : memref<!tpu.dma_semaphore, #tpu.memory_space<semaphore_mem>>)
      %c1_i32_6 = arith.constant 1 : i32
      %c0_i32_7 = arith.constant 0 : i32
      %c0_i32_8 = arith.constant 0 : i32
      %10 = tpu.memref_slice %arg2[%c0_i32_7, %c0_i32_8] : memref<2x1536xf32, #tpu.memory_space<any>> -> memref<2x1536xf32, #tpu.memory_space<any>>
      %c0_i32_9 = arith.constant 0 : i32
      %c1024_i32_10 = arith.constant 1024 : i32
      %11 = tpu.memref_slice %arg4[%c0_i32_9, %c1024_i32_10] : memref<2x4608xf32, #tpu.memory_space<any>> -> memref<2x1536xf32, #tpu.memory_space<any>>
      %12 = tpu.memref_slice %arg5[%c1_i32_6] : memref<3x!tpu.dma_semaphore, #tpu.memory_space<semaphore_mem>> -> memref<1x!tpu.dma_semaphore, #tpu.memory_space<semaphore_mem>>
      %13 = tpu.memref_squeeze %12 : memref<1x!tpu.dma_semaphore, #tpu.memory_space<semaphore_mem>> -> memref<!tpu.dma_semaphore, #tpu.memory_space<semaphore_mem>>
      tpu.wait_dma2 semaphore(%13 : memref<!tpu.dma_semaphore, #tpu.memory_space<semaphore_mem>>) src(%10 : memref<2x1536xf32, #tpu.memory_space<any>>) dst(%11 : memref<2x1536xf32, #tpu.memory_space<any>>)
    } else {
    }
    return
  }
}

</mosaic_0001>

<llo_original>
// kernel: tpu_custom_call.1
$region0: #{tpu_custom_call.1}
  #allocation0 [shape = 'u32[]', space=smem, size = 0x4, offset = 0x4, fixed_abs, tag = 'smem constant byte address 0x4 - core index']
  #allocation1 [shape = 'u32[144,128]{1,0:T(1,128)}', space=vmem, size = 0x12000, scoped, tag = 'internal scratch']
  #allocation2 [shape = 's32[3]{0}', space=sflag, size = 0xc, scoped, tag = 'scratch operand']
  #allocation3 [shape = 's32[]', space=sflag, size = 0x4, offset = 0, fixed_abs, tag = 'sflag constant byte address 0x0 - dummy sync flag']
  #allocation4 [shape = 'u32[0]{0}', space=smem, size = 0, offset = 0, fixed_abs, tag = 'smem constant byte address 0x0 - null']
  #allocation5 [shape = 's32[]', space=sflag, size = 0x4, offset = 0, fixed_abs, tag = 'sflag constant byte address 0x0 - dummy sync flag']
  #allocation6 [shape = 'u32[0]{0}', space=smem, size = 0, offset = 0, fixed_abs, tag = 'smem constant byte address 0x0 - null']
  #allocation7 [shape = 's32[]', space=sflag, size = 0x4, offset = 0, fixed_abs, tag = 'sflag constant byte address 0x0 - dummy sync flag']
  #allocation8 [shape = 'u32[0]{0}', space=smem, size = 0, offset = 0, fixed_abs, tag = 'smem constant byte address 0x0 - null']
  %s0 = inlined_call_operand.hbm [shape: f32[2,1024], index: 0, kind: input, shape index: {}]
  %s1 = inlined_call_operand.hbm [shape: f32[2,1536], index: 1, kind: input, shape index: {}]
  %s2 = inlined_call_operand.hbm [shape: f32[2,2048], index: 2, kind: input, shape index: {}]
  %s3 = inlined_call_operand.hbm [shape: f32[2,4608], index: 3, kind: output, shape index: {}]
  %s4 = sld [smem:[#allocation0]]
  $region17: #{tpu_custom_call.1} parent=0
    _
  %s6 = ssub.s32 1, %s4
  %s7 = scalar_select 0, %s6, %s4
  loop: start=0, step=1, limit=2
  $region2: #{tpu_custom_call.1} parent=0 // loop_pre_header
    _
  $region3: #{tpu_custom_call.1} parent=0 // loop_header
    %s9 = sphi 0, %s13
    %p10 = scmp.ge.s32.totalorder %s9, 2
  $region4: #{tpu_custom_call.1} parent=0 // loop_header_branch
    %12 = sbr.rel (%p10) target = $region8
  $region5: #{tpu_custom_call.1} parent=0 // loop_body
    %s14 = sadd.s32 %s9, 1
    %p15 = scmp.eq.s32.totalorder %s9, 0
    // Predicated region
    $region9: #{tpu_custom_call.1} parent=5 // pred_check
      %p16 = pneg %p15
    $region10: #{tpu_custom_call.1} parent=5 // pred_check_branch
      %18 = sbr.rel (%p16) target = $region12
    $region11: #{tpu_custom_call.1} parent=5 // pred_region
      %s20 = sshll.u32 1, 14
      %s21 = sxor.u32 4294967295, %s20
      %s24 = sshll.u32 3, 24
      %s25 = sxor.u32 4294967295, %s24
      %s26 = sand.u32 0, %s25
      %s28 = sor.u32 %s26, 0
      %31 = dma.general %s0, 256, %s3, [#allocation2], [#allocation3], [#allocation4], %s28, 0
      %s32 = scalar_lea.hbm %s3, 640
      %s33 = scalar_lea.sflag [#allocation2], 2
      %s35 = sshll.u32 1, 14
      %s36 = sxor.u32 4294967295, %s35
      %s39 = sshll.u32 3, 24
      %s40 = sxor.u32 4294967295, %s39
      %s41 = sand.u32 0, %s40
      %s43 = sor.u32 %s41, 0
      %46 = dma.general %s2, 512, %s32, %s33, [#allocation5], [#allocation6], %s43, 0
      %s47 = smul.u32 2, 1
      %s48 = smul.u32 %s47, 8
      %s49 = sshll.u32 %s48, 4
      %50 = dma.done [#allocation2], %s49
      %s51 = smul.u32 %s47, 16
      %s52 = sshll.u32 %s51, 4
      %53 = dma.done %s33, %s52
    $region12: #{tpu_custom_call.1} parent=5 // pred_fallthru
      _
    %p54 = scmp.eq.s32.totalorder %s9, 1
    // Predicated region
    $region13: #{tpu_custom_call.1} parent=5 // pred_check
      %p55 = pneg %p54
    $region14: #{tpu_custom_call.1} parent=5 // pred_check_branch
      %57 = sbr.rel (%p55) target = $region16
    $region15: #{tpu_custom_call.1} parent=5 // pred_region
      %s58 = scalar_lea.hbm %s3, 256
      %s59 = scalar_lea.sflag [#allocation2], 1
      %s61 = sshll.u32 1, 14
      %s62 = sxor.u32 4294967295, %s61
      %s65 = sshll.u32 3, 24
      %s66 = sxor.u32 4294967295, %s65
      %s67 = sand.u32 0, %s66
      %s69 = sor.u32 %s67, 0
      %72 = dma.general %s1, 384, %s58, %s59, [#allocation7], [#allocation8], %s69, 0
      %s73 = smul.u32 2, 1
      %s74 = smul.u32 %s73, 12
      %s75 = sshll.u32 %s74, 4
      %76 = dma.done %s59, %s75
    $region16: #{tpu_custom_call.1} parent=5 // pred_fallthru
      _
  $region6: #{tpu_custom_call.1} parent=0 // loop_footer
    %s13 = sadd.s32 1, %s9
  $region7: #{tpu_custom_call.1} parent=0 // loop_footer_branch
    %8 = sbr.rel target = $region3
  $region8: #{tpu_custom_call.1} parent=0 // loop_exit
    _
  %77 = vsyncmov [#allocation2]
  %s78 = vpop.sfrf %77
  %p79 = scmp.eq.s32.totalorder %s78, 0
  %p80 = pneg %p79
  %82 = shalt.err (%p80)
  %s83 = scalar_lea.sflag [#allocation2], 1
  %84 = vsyncmov %s83
  %s85 = vpop.sfrf %84
  %p86 = scmp.eq.s32.totalorder %s85, 0
  %p87 = pneg %p86
  %89 = shalt.err (%p87)
  %s90 = scalar_lea.sflag [#allocation2], 2
  %91 = vsyncmov %s90
  %s92 = vpop.sfrf %91
  %p93 = scmp.eq.s32.totalorder %s92, 0
  %p94 = pneg %p93
  %96 = shalt.err (%p94)

</llo_original>
